<compile_context>
chip_gen: v6e
topology: v6e:2x2x1
jax: 0.10.0
libtpu: 0.0.40
codegen_flags: <defaults>
</compile_context>

<pallas_src>
import jax
import jax.numpy as jnp
from jax import lax
from jax.experimental import pallas as pl
from jax.experimental.pallas import tpu as pltpu

EPS = 1e-5


def _bn_relu(h, gamma, beta):
    """Fused training-mode BatchNorm1d + ReLU (batch stats, biased var)."""
    mean = jnp.mean(h, axis=0, keepdims=True)
    var = jnp.mean(h * h, axis=0, keepdims=True) - mean * mean   # one-pass var
    scale = gamma * lax.rsqrt(var + EPS)                         # EUP rsqrt
    shift = beta - mean * scale
    return jnp.maximum(h * scale + shift, 0.0)                   # FMA-shaped


def critic_kernel(state_ref, action_ref,
                  w1_ref, bn1_ref,          # bn1_ref: (3, 512) = [b1; gamma1; beta1]
                  w2x_ref, w2a_ref, bn2_ref,  # bn2_ref: (3, 256) = [b2; gamma2; beta2]
                  w3_ref, b3_ref,           # w3_ref: (1, 256) row, b3: (1, 1)
                  out_ref):
    bf16 = jnp.bfloat16
    state = state_ref[...]
    action = action_ref[...]
    bn1 = bn1_ref[...]
    bn2 = bn2_ref[...]

    # fc1 -> bn1 -> relu  (bf16 MXU operands, f32 accumulation)
    h1 = jnp.dot(state.astype(bf16), w1_ref[...].astype(bf16),
                 preferred_element_type=jnp.float32) + bn1[0:1, :]
    h1 = _bn_relu(h1, bn1[1:2, :], bn1[2:3, :])

    # fc2 on concat([h1, action]) via split matmul -> bn2 -> relu
    h2 = (jnp.dot(h1.astype(bf16), w2x_ref[...].astype(bf16),
                  preferred_element_type=jnp.float32)
          + jnp.dot(action.astype(bf16), w2a_ref[...].astype(bf16),
                    preferred_element_type=jnp.float32)
          + bn2[0:1, :])
    h2 = _bn_relu(h2, bn2[1:2, :], bn2[2:3, :])

    # fc3 -> Q value: N=1 output, so VPU mul + lane reduce instead of MXU.
    q = jnp.sum(h2 * w3_ref[...], axis=-1, keepdims=True) + b3_ref[...]
    out_ref[...] = q.astype(out_ref.dtype)


def _full_spec(shape):
    # whole-array block resident in VMEM (single grid point)
    return pl.BlockSpec(shape, lambda: (0,) * len(shape))


def critic_forward(state, action, params):
    B = state.shape[0]
    ins = (state, action,
           params["w1"], params["bn1"],
           params["w2x"], params["w2a"], params["bn2"],
           params["w3"], params["b3"])
    return pl.pallas_call(
        critic_kernel,
        out_shape=jax.ShapeDtypeStruct((B, 1), jnp.float32),
        in_specs=[_full_spec(x.shape) for x in ins],
        out_specs=_full_spec((B, 1)),
        # True footprint ~1.2 MiB; 8 MiB leaves headroom and fits every
        # generation's scoped VMEM (v7x default 32 MiB of 64 MiB physical).
        compiler_params=pltpu.CompilerParams(vmem_limit_bytes=8 << 20),
    )(*ins)


def init_params(key, state_size, action_size):
    """Deterministic init mirroring CriticNet.reset_parameters / nn.Linear defaults."""
    H1, H2 = 512, 256
    ks = jax.random.split(key, 6)

    # fc1: weight uniform(+/- 1/sqrt(weight.size(0)=512)), bias default +/- 1/sqrt(state_size)
    lim1 = 1.0 / jnp.sqrt(jnp.float32(H1))
    w1 = jax.random.uniform(ks[0], (state_size, H1), jnp.float32, -lim1, lim1)
    lb1 = 1.0 / jnp.sqrt(jnp.float32(state_size))
    b1 = jax.random.uniform(ks[1], (1, H1), jnp.float32, -lb1, lb1)

    # fc2: weight uniform(+/- 1/sqrt(256)), input dim = 512 + action_size
    lim2 = 1.0 / jnp.sqrt(jnp.float32(H2))
    w2 = jax.random.uniform(ks[2], (H1 + action_size, H2), jnp.float32, -lim2, lim2)
    w2x, w2a = w2[:H1], w2[H1:]
    fan_in2 = H1 + action_size
    lb2 = 1.0 / jnp.sqrt(jnp.float32(fan_in2))
    b2 = jax.random.uniform(ks[3], (1, H2), jnp.float32, -lb2, lb2)

    # fc3: weight uniform(-3e-3, 3e-3) as a (1, 256) row, bias default +/- 1/sqrt(256)
    w3 = jax.random.uniform(ks[4], (1, H2), jnp.float32, -0.003, 0.003)
    lb3 = 1.0 / jnp.sqrt(jnp.float32(H2))
    b3 = jax.random.uniform(ks[5], (1, 1), jnp.float32, -lb3, lb3)

    # BatchNorm1d params: gamma=1, beta=0.  Pack [bias; gamma; beta] per layer.
    bn1 = jnp.concatenate([b1, jnp.ones((1, H1), jnp.float32),
                           jnp.zeros((1, H1), jnp.float32)], axis=0)   # (3, 512)
    bn2 = jnp.concatenate([b2, jnp.ones((1, H2), jnp.float32),
                           jnp.zeros((1, H2), jnp.float32)], axis=0)   # (3, 256)

    return dict(w1=w1, bn1=bn1, w2x=w2x, w2a=w2a, bn2=bn2, w3=w3, b3=b3)


def reference_forward(state, action, p, use_bf16=True):
    """Pure-JAX reference with the same math as the kernel (optionally bf16 matmul operands)."""
    cast = (lambda x: x.astype(jnp.bfloat16)) if use_bf16 else (lambda x: x)
    h1 = jnp.dot(cast(state), cast(p["w1"]),
                 preferred_element_type=jnp.float32) + p["bn1"][0:1]
    h1 = _bn_relu(h1, p["bn1"][1:2], p["bn1"][2:3])
    h2 = (jnp.dot(cast(h1), cast(p["w2x"]), preferred_element_type=jnp.float32)
          + jnp.dot(cast(action), cast(p["w2a"]), preferred_element_type=jnp.float32)
          + p["bn2"][0:1])
    h2 = _bn_relu(h2, p["bn2"][1:2], p["bn2"][2:3])
    return jnp.sum(h2 * p["w3"], axis=-1, keepdims=True) + p["b3"]


if __name__ == "__main__":
    B, STATE, ACTION = 8, 32, 4
    key = jax.random.PRNGKey(0)
    kp, ks, ka = jax.random.split(key, 3)

    params = init_params(kp, STATE, ACTION)
    state = jax.random.normal(ks, (B, STATE), jnp.float32)
    action = jax.random.normal(ka, (B, ACTION), jnp.float32)

    out = critic_forward(state, action, params)
    out = jax.block_until_ready(out)
    assert out.shape == (B, 1)

    # Numerics match the bf16-operand reference tightly ...
    ref_bf16 = reference_forward(state, action, params, use_bf16=True)
    assert jnp.allclose(out, ref_bf16, atol=2e-3, rtol=2e-3), (out, ref_bf16)
    # ... and the full-f32 module semantics within bf16-operand error.
    ref_f32 = reference_forward(state, action, params, use_bf16=False)
    assert jnp.allclose(out, ref_f32, atol=5e-2, rtol=5e-2), (out, ref_f32)

    print("KERNEL_OK")
</pallas_src>

<mosaic_0001>
module attributes {stable_mosaic.version = 11 : i64} {
  func.func @critic_kernel(%arg0: memref<8x32xf32, #tpu.memory_space<vmem>>, %arg1: memref<8x4xf32, #tpu.memory_space<vmem>>, %arg2: memref<32x512xf32, #tpu.memory_space<vmem>>, %arg3: memref<3x512xf32, #tpu.memory_space<vmem>>, %arg4: memref<512x256xf32, #tpu.memory_space<vmem>>, %arg5: memref<4x256xf32, #tpu.memory_space<vmem>>, %arg6: memref<3x256xf32, #tpu.memory_space<vmem>>, %arg7: memref<1x256xf32, #tpu.memory_space<vmem>>, %arg8: memref<1x1xf32, #tpu.memory_space<vmem>>, %arg9: memref<8x1xf32, #tpu.memory_space<vmem>>) attributes {dimension_semantics = [], scalar_prefetch = 0 : i64, scratch_operands = 0 : i64, tpu.core_type = #tpu.core_type<tc>} {
    %c0 = arith.constant 0 : index
    %c0_0 = arith.constant 0 : index
    %0 = vector.load %arg0[%c0, %c0_0] : memref<8x32xf32, #tpu.memory_space<vmem>>, vector<8x32xf32>
    %c0_1 = arith.constant 0 : index
    %c0_2 = arith.constant 0 : index
    %1 = vector.load %arg1[%c0_1, %c0_2] : memref<8x4xf32, #tpu.memory_space<vmem>>, vector<8x4xf32>
    %c0_3 = arith.constant 0 : index
    %c0_4 = arith.constant 0 : index
    %2 = vector.load %arg3[%c0_3, %c0_4] : memref<3x512xf32, #tpu.memory_space<vmem>>, vector<3x512xf32>
    %c0_5 = arith.constant 0 : index
    %c0_6 = arith.constant 0 : index
    %3 = vector.load %arg6[%c0_5, %c0_6] : memref<3x256xf32, #tpu.memory_space<vmem>>, vector<3x256xf32>
    %4 = arith.truncf %0 : vector<8x32xf32> to vector<8x32xbf16>
    %c0_7 = arith.constant 0 : index
    %c0_8 = arith.constant 0 : index
    %5 = vector.load %arg2[%c0_7, %c0_8] : memref<32x512xf32, #tpu.memory_space<vmem>>, vector<32x512xf32>
    %6 = arith.truncf %5 : vector<32x512xf32> to vector<32x512xbf16>
    %cst = arith.constant dense<0.000000e+00> : vector<8x512xf32>
    %7 = tpu.matmul %4, %6, %cst {dimension_numbers = #tpu.dot_dimension_numbers<[1], [0], [0], [1], [0, 0, 1, 1], [], []>} : vector<8x32xbf16>, vector<32x512xbf16>, vector<8x512xf32> -> vector<8x512xf32>
    %8 = vector.extract_strided_slice %2 {offsets = [0, 0], sizes = [1, 512], strides = [1, 1]} : vector<3x512xf32> to vector<1x512xf32>
    %9 = vector.broadcast %8 : vector<1x512xf32> to vector<8x512xf32>
    %10 = arith.addf %7, %9 : vector<8x512xf32>
    %11 = vector.extract_strided_slice %2 {offsets = [1, 0], sizes = [1, 512], strides = [1, 1]} : vector<3x512xf32> to vector<1x512xf32>
    %12 = vector.extract_strided_slice %2 {offsets = [2, 0], sizes = [1, 512], strides = [1, 1]} : vector<3x512xf32> to vector<1x512xf32>
    %cst_9 = arith.constant dense<0.000000e+00> : vector<512xf32>
    %13 = vector.multi_reduction <add>, %10, %cst_9 [0] : vector<8x512xf32> to vector<512xf32>
    %14 = vector.shape_cast %13 : vector<512xf32> to vector<1x512xf32>
    %cst_10 = arith.constant 8.000000e+00 : f32
    %15 = vector.broadcast %cst_10 : f32 to vector<1x512xf32>
    %16 = arith.divf %14, %15 : vector<1x512xf32>
    %17 = arith.mulf %10, %10 : vector<8x512xf32>
    %cst_11 = arith.constant dense<0.000000e+00> : vector<512xf32>
    %18 = vector.multi_reduction <add>, %17, %cst_11 [0] : vector<8x512xf32> to vector<512xf32>
    %19 = vector.shape_cast %18 : vector<512xf32> to vector<1x512xf32>
    %cst_12 = arith.constant 8.000000e+00 : f32
    %20 = vector.broadcast %cst_12 : f32 to vector<1x512xf32>
    %21 = arith.divf %19, %20 : vector<1x512xf32>
    %22 = arith.mulf %16, %16 : vector<1x512xf32>
    %23 = arith.subf %21, %22 : vector<1x512xf32>
    %cst_13 = arith.constant 9.99999974E-6 : f32
    %24 = vector.broadcast %cst_13 : f32 to vector<1x512xf32>
    %25 = arith.addf %23, %24 : vector<1x512xf32>
    %26 = math.rsqrt %25 : vector<1x512xf32>
    %27 = arith.mulf %11, %26 : vector<1x512xf32>
    %28 = arith.mulf %16, %27 : vector<1x512xf32>
    %29 = arith.subf %12, %28 : vector<1x512xf32>
    %30 = vector.broadcast %27 : vector<1x512xf32> to vector<8x512xf32>
    %31 = arith.mulf %10, %30 : vector<8x512xf32>
    %32 = vector.broadcast %29 : vector<1x512xf32> to vector<8x512xf32>
    %33 = arith.addf %31, %32 : vector<8x512xf32>
    %cst_14 = arith.constant 0.000000e+00 : f32
    %34 = vector.broadcast %cst_14 : f32 to vector<8x512xf32>
    %35 = arith.maximumf %33, %34 : vector<8x512xf32>
    %36 = arith.truncf %35 : vector<8x512xf32> to vector<8x512xbf16>
    %c0_15 = arith.constant 0 : index
    %c0_16 = arith.constant 0 : index
    %37 = vector.load %arg4[%c0_15, %c0_16] : memref<512x256xf32, #tpu.memory_space<vmem>>, vector<512x256xf32>
    %38 = arith.truncf %37 : vector<512x256xf32> to vector<512x256xbf16>
    %cst_17 = arith.constant dense<0.000000e+00> : vector<8x256xf32>
    %39 = tpu.matmul %36, %38, %cst_17 {dimension_numbers = #tpu.dot_dimension_numbers<[1], [0], [0], [1], [0, 0, 1, 1], [], []>} : vector<8x512xbf16>, vector<512x256xbf16>, vector<8x256xf32> -> vector<8x256xf32>
    %40 = arith.truncf %1 : vector<8x4xf32> to vector<8x4xbf16>
    %c0_18 = arith.constant 0 : index
    %c0_19 = arith.constant 0 : index
    %41 = vector.load %arg5[%c0_18, %c0_19] : memref<4x256xf32, #tpu.memory_space<vmem>>, vector<4x256xf32>
    %42 = arith.truncf %41 : vector<4x256xf32> to vector<4x256xbf16>
    %cst_20 = arith.constant dense<0.000000e+00> : vector<8x256xf32>
    %43 = tpu.matmul %40, %42, %cst_20 {dimension_numbers = #tpu.dot_dimension_numbers<[1], [0], [0], [1], [0, 0, 1, 1], [], []>} : vector<8x4xbf16>, vector<4x256xbf16>, vector<8x256xf32> -> vector<8x256xf32>
    %44 = arith.addf %39, %43 : vector<8x256xf32>
    %45 = vector.extract_strided_slice %3 {offsets = [0, 0], sizes = [1, 256], strides = [1, 1]} : vector<3x256xf32> to vector<1x256xf32>
    %46 = vector.broadcast %45 : vector<1x256xf32> to vector<8x256xf32>
    %47 = arith.addf %44, %46 : vector<8x256xf32>
    %48 = vector.extract_strided_slice %3 {offsets = [1, 0], sizes = [1, 256], strides = [1, 1]} : vector<3x256xf32> to vector<1x256xf32>
    %49 = vector.extract_strided_slice %3 {offsets = [2, 0], sizes = [1, 256], strides = [1, 1]} : vector<3x256xf32> to vector<1x256xf32>
    %cst_21 = arith.constant dense<0.000000e+00> : vector<256xf32>
    %50 = vector.multi_reduction <add>, %47, %cst_21 [0] : vector<8x256xf32> to vector<256xf32>
    %51 = vector.shape_cast %50 : vector<256xf32> to vector<1x256xf32>
    %cst_22 = arith.constant 8.000000e+00 : f32
    %52 = vector.broadcast %cst_22 : f32 to vector<1x256xf32>
    %53 = arith.divf %51, %52 : vector<1x256xf32>
    %54 = arith.mulf %47, %47 : vector<8x256xf32>
    %cst_23 = arith.constant dense<0.000000e+00> : vector<256xf32>
    %55 = vector.multi_reduction <add>, %54, %cst_23 [0] : vector<8x256xf32> to vector<256xf32>
    %56 = vector.shape_cast %55 : vector<256xf32> to vector<1x256xf32>
    %cst_24 = arith.constant 8.000000e+00 : f32
    %57 = vector.broadcast %cst_24 : f32 to vector<1x256xf32>
    %58 = arith.divf %56, %57 : vector<1x256xf32>
    %59 = arith.mulf %53, %53 : vector<1x256xf32>
    %60 = arith.subf %58, %59 : vector<1x256xf32>
    %cst_25 = arith.constant 9.99999974E-6 : f32
    %61 = vector.broadcast %cst_25 : f32 to vector<1x256xf32>
    %62 = arith.addf %60, %61 : vector<1x256xf32>
    %63 = math.rsqrt %62 : vector<1x256xf32>
    %64 = arith.mulf %48, %63 : vector<1x256xf32>
    %65 = arith.mulf %53, %64 : vector<1x256xf32>
    %66 = arith.subf %49, %65 : vector<1x256xf32>
    %67 = vector.broadcast %64 : vector<1x256xf32> to vector<8x256xf32>
    %68 = arith.mulf %47, %67 : vector<8x256xf32>
    %69 = vector.broadcast %66 : vector<1x256xf32> to vector<8x256xf32>
    %70 = arith.addf %68, %69 : vector<8x256xf32>
    %cst_26 = arith.constant 0.000000e+00 : f32
    %71 = vector.broadcast %cst_26 : f32 to vector<8x256xf32>
    %72 = arith.maximumf %70, %71 : vector<8x256xf32>
    %c0_27 = arith.constant 0 : index
    %c0_28 = arith.constant 0 : index
    %73 = vector.load %arg7[%c0_27, %c0_28] : memref<1x256xf32, #tpu.memory_space<vmem>>, vector<1x256xf32>
    %74 = vector.broadcast %73 : vector<1x256xf32> to vector<8x256xf32>
    %75 = arith.mulf %72, %74 : vector<8x256xf32>
    %cst_29 = arith.constant dense<0.000000e+00> : vector<8xf32>
    %76 = vector.multi_reduction <add>, %75, %cst_29 [1] : vector<8x256xf32> to vector<8xf32>
    %77 = vector.shape_cast %76 : vector<8xf32> to vector<8x1xf32>
    %c0_30 = arith.constant 0 : index
    %c0_31 = arith.constant 0 : index
    %78 = vector.load %arg8[%c0_30, %c0_31] : memref<1x1xf32, #tpu.memory_space<vmem>>, vector<1x1xf32>
    %79 = vector.broadcast %78 : vector<1x1xf32> to vector<8x1xf32>
    %80 = arith.addf %77, %79 : vector<8x1xf32>
    %c0_32 = arith.constant 0 : index
    %c0_33 = arith.constant 0 : index
    %81 = vector.load %arg9[%c0_32, %c0_33] : memref<8x1xf32, #tpu.memory_space<vmem>>, vector<8x1xf32>
    tpu.vector_store %arg9[%c0_32, %c0_33], %80 {strides = array<i32>} : memref<8x1xf32, #tpu.memory_space<vmem>>, vector<8x1xf32>,
    return
  }
}

</mosaic_0001>

<llo_original>
// kernel: tpu_custom_call.1
$region0: #{tpu_custom_call.1}
  #allocation0 [shape = 'u32[]', space=smem, size = 0x4, offset = 0x4, fixed_abs, tag = 'smem constant byte address 0x4 - core index']
  #allocation1 [shape = 'u32[144,128]{1,0:T(1,128)}', space=vmem, size = 0x12000, scoped, tag = 'internal scratch']
  #allocation2 [shape = 'f32[1,1]{1,0:T(1,128)S(1)}', space=vmem, size = 0x200, scoped, tag = 'scoped memory for tpu_custom_call.1']
  %s0 = inlined_call_operand.hbm [shape: f32[8,32], index: 0, kind: input, shape index: {}]
  %s1 = inlined_call_operand.vmem [shape: f32[8,4], index: 1, kind: input, shape index: {}]
  %s2 = inlined_call_operand.hbm [shape: f32[32,512], index: 2, kind: input, shape index: {}]
  %s3 = inlined_call_operand.vmem [shape: f32[3,512], index: 3, kind: input, shape index: {}]
  %s4 = inlined_call_operand.hbm [shape: f32[512,256], index: 4, kind: input, shape index: {}]
  %s5 = inlined_call_operand.hbm [shape: f32[4,256], index: 5, kind: input, shape index: {}]
  %s6 = inlined_call_operand.vmem [shape: f32[3,256], index: 6, kind: input, shape index: {}]
  %s7 = inlined_call_operand.vmem [shape: f32[1,256], index: 7, kind: input, shape index: {}]
  %s8 = inlined_call_operand.<no memory space> [shape: f32[1,1], index: 8, kind: input, shape index: {}]
  %s9 = inlined_call_operand.vmem [shape: f32[8,1], index: 9, kind: output, shape index: {}]
  %s10 = sld [smem:[#allocation0]]
  $region62: #{tpu_custom_call.1} parent=0
    _
  %s12 = ssub.s32 1, %s10
  %s13 = scalar_select 0, %s12, %s10
  %v14 = vstv %s8
  %15 = vst [vmem:[#allocation2] sm:$0x1] %v14
  $region1: #{tpu_custom_call.1} parent=0
    #allocation3 [shape = 'u8[4096]{0}', space=vmem, size = 0x1000, scoped, tag = 'input window, operand 0, single buffered']
    #allocation4 [shape = 's32[1]{0}', space=sflag, size = 0x4, scoped, tag = 'scoped memory for tpu_custom_call.1']
    #allocation5 [shape = 'u8[65536]{0}', space=vmem, size = 0x10000, scoped, tag = 'input window, operand 2, single buffered']
    #allocation6 [shape = 's32[1]{0}', space=sflag, size = 0x4, scoped, tag = 'scoped memory for tpu_custom_call.1']
    #allocation7 [shape = 'u8[524288]{0}', space=vmem, size = 0x80000, scoped, tag = 'input window, operand 4, single buffered']
    #allocation8 [shape = 'u8[4096]{0}', space=vmem, size = 0x1000, scoped, tag = 'input window, operand 5, single buffered']
    #allocation9 [shape = 's32[1]{0}', space=sflag, size = 0x4, scoped, tag = 'scoped memory for tpu_custom_call.1']
    %16 = vsyncpa [#allocation4], 0
    %17 = vsyncpa [#allocation6], 0
    %18 = vsyncpa [#allocation9], 0
    // Predicated region
    $region2: #{tpu_custom_call.1} parent=1 // pred_check
      _
    $region3: #{tpu_custom_call.1} parent=1 // pred_check_branch
      %20 = sbr.rel (0) target = $region5
    $region4: #{tpu_custom_call.1} parent=1 // pred_region
      %s22 = ssub.s32 128, 128
      %23 = vsyncadd [#allocation4], %s22
      %s25 = sshll.u32 [#allocation3], 4
      %s26 = int_to_ptr.vmem [resolvable:$true] %s25
      %28 = dma.hbm_to_vmem [thread:$0]  %s0, 128, %s26, [#allocation4]
    $region5: #{tpu_custom_call.1} parent=1 // pred_fallthru
      _
    // Predicated region
    $region6: #{tpu_custom_call.1} parent=1 // pred_check
      _
    $region7: #{tpu_custom_call.1} parent=1 // pred_check_branch
      %30 = sbr.rel (0) target = $region9
    $region8: #{tpu_custom_call.1} parent=1 // pred_region
      _
    $region9: #{tpu_custom_call.1} parent=1 // pred_fallthru
      _
    // Predicated region
    $region10: #{tpu_custom_call.1} parent=1 // pred_check
      _
    $region11: #{tpu_custom_call.1} parent=1 // pred_check_branch
      %32 = sbr.rel (0) target = $region13
    $region12: #{tpu_custom_call.1} parent=1 // pred_region
      %s34 = ssub.s32 2048, 2048
      %35 = vsyncadd [#allocation6], %s34
      %s36 = sshll.u32 [#allocation5], 4
      %s37 = int_to_ptr.vmem [resolvable:$true] %s36
      %42 = dma.hbm_to_vmem [thread:$0]  %s2, 2048, %s37, [#allocation6], 512, 512, 32
    $region13: #{tpu_custom_call.1} parent=1 // pred_fallthru
      _
    // Predicated region
    $region14: #{tpu_custom_call.1} parent=1 // pred_check
      _
    $region15: #{tpu_custom_call.1} parent=1 // pred_check_branch
      %44 = sbr.rel (0) target = $region17
    $region16: #{tpu_custom_call.1} parent=1 // pred_region
      _
    $region17: #{tpu_custom_call.1} parent=1 // pred_fallthru
      _
    // Predicated region
    $region18: #{tpu_custom_call.1} parent=1 // pred_check
      _
    $region19: #{tpu_custom_call.1} parent=1 // pred_check_branch
      %46 = sbr.rel (0) target = $region21
    $region20: #{tpu_custom_call.1} parent=1 // pred_region
      %s48 = ssub.s32 16384, 16384
      %49 = vsyncadd [#allocation6], %s48
      %s50 = sshll.u32 [#allocation7], 4
      %s51 = int_to_ptr.vmem [resolvable:$true] %s50
      %56 = dma.hbm_to_vmem [thread:$0]  %s4, 16384, %s51, [#allocation6], 256, 256, 16
    $region21: #{tpu_custom_call.1} parent=1 // pred_fallthru
      _
    // Predicated region
    $region22: #{tpu_custom_call.1} parent=1 // pred_check
      _
    $region23: #{tpu_custom_call.1} parent=1 // pred_check_branch
      %58 = sbr.rel (0) target = $region25
    $region24: #{tpu_custom_call.1} parent=1 // pred_region
      %s60 = ssub.s32 128, 128
      %61 = vsyncadd [#allocation9], %s60
      %s63 = sshll.u32 [#allocation8], 4
      %s64 = int_to_ptr.vmem [resolvable:$true] %s63
      %66 = dma.hbm_to_vmem [thread:$0]  %s5, 128, %s64, [#allocation9]
    $region25: #{tpu_custom_call.1} parent=1 // pred_fallthru
      _
    // Predicated region
    $region26: #{tpu_custom_call.1} parent=1 // pred_check
      _
    $region27: #{tpu_custom_call.1} parent=1 // pred_check_branch
      %68 = sbr.rel (0) target = $region29
    $region28: #{tpu_custom_call.1} parent=1 // pred_region
      _
    $region29: #{tpu_custom_call.1} parent=1 // pred_fallthru
      _
    // Predicated region
    $region30: #{tpu_custom_call.1} parent=1 // pred_check
      _
    $region31: #{tpu_custom_call.1} parent=1 // pred_check_branch
      %70 = sbr.rel (0) target = $region33
    $region32: #{tpu_custom_call.1} parent=1 // pred_region
      _
    $region33: #{tpu_custom_call.1} parent=1 // pred_fallthru
      _
    // Predicated region
    $region34: #{tpu_custom_call.1} parent=1 // pred_check
      _
    $region35: #{tpu_custom_call.1} parent=1 // pred_check_branch
      %72 = sbr.rel (0) target = $region37
    $region36: #{tpu_custom_call.1} parent=1 // pred_region
      _
    $region37: #{tpu_custom_call.1} parent=1 // pred_fallthru
      _
    // Predicated region
    $region38: #{tpu_custom_call.1} parent=1 // pred_check
      _
    $region39: #{tpu_custom_call.1} parent=1 // pred_check_branch
      %74 = sbr.rel (0) target = $region41
    $region40: #{tpu_custom_call.1} parent=1 // pred_region
      %75 = dma.done [#allocation4], 128
    $region41: #{tpu_custom_call.1} parent=1 // pred_fallthru
      _
    // Predicated region
    $region42: #{tpu_custom_call.1} parent=1 // pred_check
      _
    $region43: #{tpu_custom_call.1} parent=1 // pred_check_branch
      %77 = sbr.rel (0) target = $region45
    $region44: #{tpu_custom_call.1} parent=1 // pred_region
      %78 = dma.done [#allocation6], 2048
    $region45: #{tpu_custom_call.1} parent=1 // pred_fallthru
      _
    // Predicated region
    $region46: #{tpu_custom_call.1} parent=1 // pred_check
      _
    $region47: #{tpu_custom_call.1} parent=1 // pred_check_branch
      %80 = sbr.rel (0) target = $region49
    $region48: #{tpu_custom_call.1} parent=1 // pred_region
      %81 = dma.done [#allocation6], 16384
    $region49: #{tpu_custom_call.1} parent=1 // pred_fallthru
      _
    // Predicated region
    $region50: #{tpu_custom_call.1} parent=1 // pred_check
      _
    $region51: #{tpu_custom_call.1} parent=1 // pred_check_branch
      %83 = sbr.rel (0) target = $region53
    $region52: #{tpu_custom_call.1} parent=1 // pred_region
      %84 = dma.done [#allocation9], 128
    $region53: #{tpu_custom_call.1} parent=1 // pred_fallthru
      _
    %v86 = vld [vmem:[#allocation3] sm:$0xff]
    %v87 = vld [vmem:[%s1] sm:$0xff]
    %v88 = vld [vmem:[%s3] sm:$0x77]
    %v89 = vld [vmem:[%s3 + $0x8] sm:$0x77]
    %v90 = vld [vmem:[%s6] sm:$0x77]
    %v91 = vpack.c.bf16 %v86, %v86
    %v92 = vld [vmem:[#allocation5] sm:$0xff]
    %v93 = vld [vmem:[#allocation5 + $0x8] sm:$0xff]
    %v94 = vld [vmem:[#allocation5 + $0x10] sm:$0xff]
    %v95 = vld [vmem:[#allocation5 + $0x18] sm:$0xff]
    %v96 = vld [vmem:[#allocation5 + $0x20] sm:$0xff]
    %v97 = vld [vmem:[#allocation5 + $0x28] sm:$0xff]
    %v98 = vld [vmem:[#allocation5 + $0x30] sm:$0xff]
    %v99 = vld [vmem:[#allocation5 + $0x38] sm:$0xff]
    %v100 = vld [vmem:[#allocation5 + $0x40] sm:$0xff]
    %v101 = vld [vmem:[#allocation5 + $0x48] sm:$0xff]
    %v102 = vld [vmem:[#allocation5 + $0x50] sm:$0xff]
    %v103 = vld [vmem:[#allocation5 + $0x58] sm:$0xff]
    %v104 = vld [vmem:[#allocation5 + $0x60] sm:$0xff]
    %v105 = vld [vmem:[#allocation5 + $0x68] sm:$0xff]
    %v106 = vld [vmem:[#allocation5 + $0x70] sm:$0xff]
    %v107 = vld [vmem:[#allocation5 + $0x78] sm:$0xff]
    %v108 = vpack.c.bf16 %v96, %v92
    %v109 = vpack.c.bf16 %v97, %v93
    %v110 = vpack.c.bf16 %v98, %v94
    %v111 = vpack.c.bf16 %v99, %v95
    %v112 = vpack.c.bf16 %v104, %v100
    %v113 = vpack.c.bf16 %v105, %v101
    %v114 = vpack.c.bf16 %v106, %v102
    %v115 = vpack.c.bf16 %v107, %v103
    %v118 = vlaneseq
    %v119 = vshrl.u32 %v118, 7
    %v120 = vsub.s32 0, %v119
    %v121 = vrot.slane %v88, %v120
    %v122 = vlaneseq
    %v123 = vshrl.u32 %v122, 7
    %v124 = vsub.s32 4, %v123
    %v125 = vrot.slane %v88, %v124
    %v126 = vlaneseq
    %v127 = vshrl.u32 %v126, 7
    %v128 = vsub.s32 0, %v127
    %v129 = vrot.slane %v89, %v128
    %v130 = vlaneseq
    %v131 = vshrl.u32 %v130, 7
    %v132 = vsub.s32 4, %v131
    %v133 = vrot.slane %v89, %v132
    %v138 = vlaneseq
    %v139 = vshrl.u32 %v138, 7
    %v140 = vsub.s32 0, %v139
    %v141 = vrot.slane %v121, %v140
    %v142 = vlaneseq
    %v143 = vshrl.u32 %v142, 7
    %v144 = vsub.s32 0, %v143
    %v145 = vrot.slane %v125, %v144
    %v146 = vlaneseq
    %v147 = vshrl.u32 %v146, 7
    %v148 = vsub.s32 0, %v147
    %v149 = vrot.slane %v129, %v148
    %v150 = vlaneseq
    %v151 = vshrl.u32 %v150, 7
    %v152 = vsub.s32 0, %v151
    %v153 = vrot.slane %v133, %v152
    %vm154 = vcmask 261120
    %v156 = vsel %vm154, %v91, 0
    %158 = vmatprep.subr.bf16.mxu0 0
    %159 = vmatpush1.bf16.msra.mxu0 0
    %160 = vmatprep.subr.bf16.mxu0 0
    %161 = vmatpush1.bf16.msra.mxu0 0
    %162 = vmatprep.subr.bf16.mxu0 0
    %163 = vmatpush1.bf16.msra.mxu0 0
    %164 = vmatprep.subr.bf16.mxu0 0
    %165 = vmatpush1.bf16.msra.mxu0 0
    %166 = vmatprep.subr.bf16.mxu0 0
    %167 = vmatpush1.bf16.msra.mxu0 0
    %168 = vmatprep.subr.bf16.mxu0 0
    %169 = vmatpush1.bf16.msra.mxu0 0
    %170 = vmatprep.subr.bf16.mxu0 %v113
    %171 = vmatpush1.bf16.msra.mxu0 %v112
    %172 = vmatprep.subr.bf16.mxu0 %v109
    %173 = vmatpush1.bf16.msra.mxu0 %v108
    %174 = vmatprep.subr.bf16.mxu0 0
    %175 = vmatpush2.bf16.msra.mxu0 0
    %176 = vmatprep.subr.bf16.mxu0 0
    %177 = vmatpush2.bf16.msra.mxu0 0
    %178 = vmatprep.subr.bf16.mxu0 0
    %179 = vmatpush2.bf16.msra.mxu0 0
    %180 = vmatprep.subr.bf16.mxu0 0
    %181 = vmatpush2.bf16.msra.mxu0 0
    %182 = vmatprep.subr.bf16.mxu0 0
    %183 = vmatpush2.bf16.msra.mxu0 0
    %184 = vmatprep.subr.bf16.mxu0 0
    %185 = vmatpush2.bf16.msra.mxu0 0
    %186 = vmatprep.subr.bf16.mxu0 0
    %187 = vmatpush2.bf16.msra.mxu0 0
    %188 = vmatprep.subr.bf16.mxu0 0
    %189 = vmatpush2.bf16.msra.mxu0 0
    %190 = vmatprep.mubr.bf16.mxu0 0
    %191 = vmatmul.mubr.bf16.gmra.mxu0 %v156
    %v192 = vpop.f32.mrf.mxu0
    %v193 = vadd.f32 %v141, %v192
    %v194 = vpop.f32.mrf.mxu0
    %v195 = vadd.f32 %v145, %v194
    %v196 = vpop.f32.mrf.mxu0
    %v197 = vpop.f32.mrf.mxu0
    %198 = vdwg.mxu0
    %199 = vmatprep.subr.bf16.mxu0 0
    %200 = vmatpush1.bf16.msra.mxu0 0
    %201 = vmatprep.subr.bf16.mxu0 0
    %202 = vmatpush1.bf16.msra.mxu0 0
    %203 = vmatprep.subr.bf16.mxu0 0
    %204 = vmatpush1.bf16.msra.mxu0 0
    %205 = vmatprep.subr.bf16.mxu0 0
    %206 = vmatpush1.bf16.msra.mxu0 0
    %207 = vmatprep.subr.bf16.mxu0 0
    %208 = vmatpush1.bf16.msra.mxu0 0
    %209 = vmatprep.subr.bf16.mxu0 0
    %210 = vmatpush1.bf16.msra.mxu0 0
    %211 = vmatprep.subr.bf16.mxu0 %v115
    %212 = vmatpush1.bf16.msra.mxu0 %v114
    %213 = vmatprep.subr.bf16.mxu0 %v111
    %214 = vmatpush1.bf16.msra.mxu0 %v110
    %215 = vmatprep.subr.bf16.mxu0 0
    %216 = vmatpush2.bf16.msra.mxu0 0
    %217 = vmatprep.subr.bf16.mxu0 0
    %218 = vmatpush2.bf16.msra.mxu0 0
    %219 = vmatprep.subr.bf16.mxu0 0
    %220 = vmatpush2.bf16.msra.mxu0 0
    %221 = vmatprep.subr.bf16.mxu0 0
    %222 = vmatpush2.bf16.msra.mxu0 0
    %223 = vmatprep.subr.bf16.mxu0 0
    %224 = vmatpush2.bf16.msra.mxu0 0
    %225 = vmatprep.subr.bf16.mxu0 0
    %226 = vmatpush2.bf16.msra.mxu0 0
    %227 = vmatprep.subr.bf16.mxu0 0
    %228 = vmatpush2.bf16.msra.mxu0 0
    %229 = vmatprep.subr.bf16.mxu0 0
    %230 = vmatpush2.bf16.msra.mxu0 0
    %231 = vmatprep.mubr.bf16.mxu0 0
    %232 = vmatmul.mubr.bf16.gmra.mxu0 %v156
    %v233 = vpop.f32.mrf.mxu0
    %v234 = vadd.f32 %v149, %v233
    %v235 = vpop.f32.mrf.mxu0
    %v236 = vadd.f32 %v153, %v235
    %v237 = vpop.f32.mrf.mxu0
    %v238 = vpop.f32.mrf.mxu0
    %239 = vdwg.mxu0
    %v240 = vrot.slane %v193, 4
    %v241 = vadd.f32 %v193, %v240
    %v242 = vrot.slane %v241, 2
    %v243 = vadd.f32 %v241, %v242
    %v244 = vrot.slane %v243, 1
    %v245 = vadd.f32 %v243, %v244
    %v246 = vrot.slane %v195, 4
    %v247 = vadd.f32 %v195, %v246
    %v248 = vrot.slane %v247, 2
    %v249 = vadd.f32 %v247, %v248
    %v250 = vrot.slane %v249, 1
    %v251 = vadd.f32 %v249, %v250
    %v252 = vrot.slane %v234, 4
    %v253 = vadd.f32 %v234, %v252
    %v254 = vrot.slane %v253, 2
    %v255 = vadd.f32 %v253, %v254
    %v256 = vrot.slane %v255, 1
    %v257 = vadd.f32 %v255, %v256
    %v258 = vrot.slane %v236, 4
    %v259 = vadd.f32 %v236, %v258
    %v260 = vrot.slane %v259, 2
    %v261 = vadd.f32 %v259, %v260
    %v262 = vrot.slane %v261, 1
    %v263 = vadd.f32 %v261, %v262
    %v264 = vrcp.pop 8.0
    %v265 = vmul.f32 %v245, %v264
    %v266 = vmul.f32 %v251, %v264
    %v267 = vmul.f32 %v257, %v264
    %v268 = vmul.f32 %v263, %v264
    %v269 = vmul.f32 %v193, %v193
    %v270 = vmul.f32 %v195, %v195
    %v271 = vmul.f32 %v234, %v234
    %v272 = vmul.f32 %v236, %v236
    %v273 = vrot.slane %v269, 4
    %v274 = vadd.f32 %v269, %v273
    %v275 = vrot.slane %v274, 2
    %v276 = vadd.f32 %v274, %v275
    %v277 = vrot.slane %v276, 1
    %v278 = vadd.f32 %v276, %v277
    %v279 = vrot.slane %v270, 4
    %v280 = vadd.f32 %v270, %v279
    %v281 = vrot.slane %v280, 2
    %v282 = vadd.f32 %v280, %v281
    %v283 = vrot.slane %v282, 1
    %v284 = vadd.f32 %v282, %v283
    %v285 = vrot.slane %v271, 4
    %v286 = vadd.f32 %v271, %v285
    %v287 = vrot.slane %v286, 2
    %v288 = vadd.f32 %v286, %v287
    %v289 = vrot.slane %v288, 1
    %v290 = vadd.f32 %v288, %v289
    %v291 = vrot.slane %v272, 4
    %v292 = vadd.f32 %v272, %v291
    %v293 = vrot.slane %v292, 2
    %v294 = vadd.f32 %v292, %v293
    %v295 = vrot.slane %v294, 1
    %v296 = vadd.f32 %v294, %v295
    %v297 = vmul.f32 %v278, %v264
    %v298 = vmul.f32 %v284, %v264
    %v299 = vmul.f32 %v290, %v264
    %v300 = vmul.f32 %v296, %v264
    %v301 = vmul.f32 %v265, %v265
    %v302 = vmul.f32 %v266, %v266
    %v303 = vmul.f32 %v267, %v267
    %v304 = vmul.f32 %v268, %v268
    %v305 = vsub.f32 %v297, %v301
    %v306 = vsub.f32 %v298, %v302
    %v307 = vsub.f32 %v299, %v303
    %v308 = vsub.f32 %v300, %v304
    %v309 = vadd.f32 %v305, 1e-05
    %v310 = vadd.f32 %v306, 1e-05
    %v311 = vadd.f32 %v307, 1e-05
    %v312 = vadd.f32 %v308, 1e-05
    %v313 = vrsqrt.pop %v309
    %v314 = vrsqrt.pop %v310
    %v315 = vrsqrt.pop %v311
    %v316 = vrsqrt.pop %v312
    %v321 = vcombine.low %v313, %v314
    %v322 = vcombine.low %v315, %v316
    %v323 = vrot.slane %v321, 7
    %v324 = vrot.slane %v322, 7
    %v327 = vmul.f32 %v88, %v323
    %v328 = vmul.f32 %v89, %v324
    %v331 = vlaneseq
    %v332 = vshrl.u32 %v331, 7
    %v333 = vsub.s32 1, %v332
    %v334 = vrot.slane %v327, %v333
    %v335 = vlaneseq
    %v336 = vshrl.u32 %v335, 7
    %v337 = vsub.s32 5, %v336
    %v338 = vrot.slane %v327, %v337
    %v339 = vlaneseq
    %v340 = vshrl.u32 %v339, 7
    %v341 = vsub.s32 1, %v340
    %v342 = vrot.slane %v328, %v341
    %v343 = vlaneseq
    %v344 = vshrl.u32 %v343, 7
    %v345 = vsub.s32 5, %v344
    %v346 = vrot.slane %v328, %v345
    %v351 = vmul.f32 %v265, %v334
    %v352 = vmul.f32 %v266, %v338
    %v353 = vmul.f32 %v267, %v342
    %v354 = vmul.f32 %v268, %v346
    %v359 = vcombine.low %v351, %v352
    %v360 = vcombine.low %v353, %v354
    %v361 = vrot.slane %v359, 6
    %v362 = vrot.slane %v360, 6
    %v365 = vsub.f32 %v88, %v361
    %v366 = vsub.f32 %v89, %v362
    %v367 = vlaneseq
    %v368 = vshrl.u32 %v367, 7
    %v369 = vsub.s32 1, %v368
    %v370 = vrot.slane %v334, %v369
    %v371 = vlaneseq
    %v372 = vshrl.u32 %v371, 7
    %v373 = vsub.s32 1, %v372
    %v374 = vrot.slane %v338, %v373
    %v375 = vlaneseq
    %v376 = vshrl.u32 %v375, 7
    %v377 = vsub.s32 1, %v376
    %v378 = vrot.slane %v342, %v377
    %v379 = vlaneseq
    %v380 = vshrl.u32 %v379, 7
    %v381 = vsub.s32 1, %v380
    %v382 = vrot.slane %v346, %v381
    %v383 = vmul.f32 %v193, %v370
    %v384 = vmul.f32 %v195, %v374
    %v385 = vmul.f32 %v234, %v378
    %v386 = vmul.f32 %v236, %v382
    %v389 = vlaneseq
    %v390 = vshrl.u32 %v389, 7
    %v391 = vsub.s32 2, %v390
    %v392 = vrot.slane %v365, %v391
    %v393 = vlaneseq
    %v394 = vshrl.u32 %v393, 7
    %v395 = vsub.s32 6, %v394
    %v396 = vrot.slane %v365, %v395
    %v397 = vlaneseq
    %v398 = vshrl.u32 %v397, 7
    %v399 = vsub.s32 2, %v398
    %v400 = vrot.slane %v366, %v399
    %v401 = vlaneseq
    %v402 = vshrl.u32 %v401, 7
    %v403 = vsub.s32 6, %v402
    %v404 = vrot.slane %v366, %v403
    %v409 = vlaneseq
    %v410 = vshrl.u32 %v409, 7
    %v411 = vsub.s32 2, %v410
    %v412 = vrot.slane %v392, %v411
    %v413 = vlaneseq
    %v414 = vshrl.u32 %v413, 7
    %v415 = vsub.s32 2, %v414
    %v416 = vrot.slane %v396, %v415
    %v417 = vlaneseq
    %v418 = vshrl.u32 %v417, 7
    %v419 = vsub.s32 2, %v418
    %v420 = vrot.slane %v400, %v419
    %v421 = vlaneseq
    %v422 = vshrl.u32 %v421, 7
    %v423 = vsub.s32 2, %v422
    %v424 = vrot.slane %v404, %v423
    %v425 = vadd.f32 %v383, %v412
    %v426 = vadd.f32 %v384, %v416
    %v427 = vadd.f32 %v385, %v420
    %v428 = vadd.f32 %v386, %v424
    %v429 = vmax.f32 %v425, 0.0
    %v430 = vmax.f32 %v426, 0.0
    %v431 = vmax.f32 %v427, 0.0
    %v432 = vmax.f32 %v428, 0.0
    %v433 = vpack.c.bf16 %v429, %v429
    %v434 = vpack.c.bf16 %v430, %v430
    %v435 = vpack.c.bf16 %v431, %v431
    %v436 = vpack.c.bf16 %v432, %v432
    %v437 = vld [vmem:[#allocation7] sm:$0xff]
    %v438 = vld [vmem:[#allocation7 + $0x8] sm:$0xff]
    %v439 = vld [vmem:[#allocation7 + $0x10] sm:$0xff]
    %v440 = vld [vmem:[#allocation7 + $0x18] sm:$0xff]
    %v441 = vld [vmem:[#allocation7 + $0x20] sm:$0xff]
    %v442 = vld [vmem:[#allocation7 + $0x28] sm:$0xff]
    %v443 = vld [vmem:[#allocation7 + $0x30] sm:$0xff]
    %v444 = vld [vmem:[#allocation7 + $0x38] sm:$0xff]
    %v445 = vld [vmem:[#allocation7 + $0x40] sm:$0xff]
    %v446 = vld [vmem:[#allocation7 + $0x48] sm:$0xff]
    %v447 = vld [vmem:[#allocation7 + $0x50] sm:$0xff]
    %v448 = vld [vmem:[#allocation7 + $0x58] sm:$0xff]
    %v449 = vld [vmem:[#allocation7 + $0x60] sm:$0xff]
    %v450 = vld [vmem:[#allocation7 + $0x68] sm:$0xff]
    %v451 = vld [vmem:[#allocation7 + $0x70] sm:$0xff]
    %v452 = vld [vmem:[#allocation7 + $0x78] sm:$0xff]
    %v453 = vld [vmem:[#allocation7 + $0x80] sm:$0xff]
    %v454 = vld [vmem:[#allocation7 + $0x88] sm:$0xff]
    %v455 = vld [vmem:[#allocation7 + $0x90] sm:$0xff]
    %v456 = vld [vmem:[#allocation7 + $0x98] sm:$0xff]
    %v457 = vld [vmem:[#allocation7 + $0xa0] sm:$0xff]
    %v458 = vld [vmem:[#allocation7 + $0xa8] sm:$0xff]
    %v459 = vld [vmem:[#allocation7 + $0xb0] sm:$0xff]
    %v460 = vld [vmem:[#allocation7 + $0xb8] sm:$0xff]
    %v461 = vld [vmem:[#allocation7 + $0xc0] sm:$0xff]
    %v462 = vld [vmem:[#allocation7 + $0xc8] sm:$0xff]
    %v463 = vld [vmem:[#allocation7 + $0xd0] sm:$0xff]
    %v464 = vld [vmem:[#allocation7 + $0xd8] sm:$0xff]
    %v465 = vld [vmem:[#allocation7 + $0xe0] sm:$0xff]
    %v466 = vld [vmem:[#allocation7 + $0xe8] sm:$0xff]
    %v467 = vld [vmem:[#allocation7 + $0xf0] sm:$0xff]
    %v468 = vld [vmem:[#allocation7 + $0xf8] sm:$0xff]
    %v469 = vld [vmem:[#allocation7 + $0x100] sm:$0xff]
    %v470 = vld [vmem:[#allocation7 + $0x108] sm:$0xff]
    %v471 = vld [vmem:[#allocation7 + $0x110] sm:$0xff]
    %v472 = vld [vmem:[#allocation7 + $0x118] sm:$0xff]
    %v473 = vld [vmem:[#allocation7 + $0x120] sm:$0xff]
    %v474 = vld [vmem:[#allocation7 + $0x128] sm:$0xff]
    %v475 = vld [vmem:[#allocation7 + $0x130] sm:$0xff]
    %v476 = vld [vmem:[#allocation7 + $0x138] sm:$0xff]
    %v477 = vld [vmem:[#allocation7 + $0x140] sm:$0xff]
    %v478 = vld [vmem:[#allocation7 + $0x148] sm:$0xff]
    %v479 = vld [vmem:[#allocation7 + $0x150] sm:$0xff]
    %v480 = vld [vmem:[#allocation7 + $0x158] sm:$0xff]
    %v481 = vld [vmem:[#allocation7 + $0x160] sm:$0xff]
    %v482 = vld [vmem:[#allocation7 + $0x168] sm:$0xff]
    %v483 = vld [vmem:[#allocation7 + $0x170] sm:$0xff]
    %v484 = vld [vmem:[#allocation7 + $0x178] sm:$0xff]
    %v485 = vld [vmem:[#allocation7 + $0x180] sm:$0xff]
    %v486 = vld [vmem:[#allocation7 + $0x188] sm:$0xff]
    %v487 = vld [vmem:[#allocation7 + $0x190] sm:$0xff]
    %v488 = vld [vmem:[#allocation7 + $0x198] sm:$0xff]
    %v489 = vld [vmem:[#allocation7 + $0x1a0] sm:$0xff]
    %v490 = vld [vmem:[#allocation7 + $0x1a8] sm:$0xff]
    %v491 = vld [vmem:[#allocation7 + $0x1b0] sm:$0xff]
    %v492 = vld [vmem:[#allocation7 + $0x1b8] sm:$0xff]
    %v493 = vld [vmem:[#allocation7 + $0x1c0] sm:$0xff]
    %v494 = vld [vmem:[#allocation7 + $0x1c8] sm:$0xff]
    %v495 = vld [vmem:[#allocation7 + $0x1d0] sm:$0xff]
    %v496 = vld [vmem:[#allocation7 + $0x1d8] sm:$0xff]
    %v497 = vld [vmem:[#allocation7 + $0x1e0] sm:$0xff]
    %v498 = vld [vmem:[#allocation7 + $0x1e8] sm:$0xff]
    %v499 = vld [vmem:[#allocation7 + $0x1f0] sm:$0xff]
    %v500 = vld [vmem:[#allocation7 + $0x1f8] sm:$0xff]
    %v501 = vld [vmem:[#allocation7 + $0x200] sm:$0xff]
    %v502 = vld [vmem:[#allocation7 + $0x208] sm:$0xff]
    %v503 = vld [vmem:[#allocation7 + $0x210] sm:$0xff]
    %v504 = vld [vmem:[#allocation7 + $0x218] sm:$0xff]
    %v505 = vld [vmem:[#allocation7 + $0x220] sm:$0xff]
    %v506 = vld [vmem:[#allocation7 + $0x228] sm:$0xff]
    %v507 = vld [vmem:[#allocation7 + $0x230] sm:$0xff]
    %v508 = vld [vmem:[#allocation7 + $0x238] sm:$0xff]
    %v509 = vld [vmem:[#allocation7 + $0x240] sm:$0xff]
    %v510 = vld [vmem:[#allocation7 + $0x248] sm:$0xff]
    %v511 = vld [vmem:[#allocation7 + $0x250] sm:$0xff]
    %v512 = vld [vmem:[#allocation7 + $0x258] sm:$0xff]
    %v513 = vld [vmem:[#allocation7 + $0x260] sm:$0xff]
    %v514 = vld [vmem:[#allocation7 + $0x268] sm:$0xff]
    %v515 = vld [vmem:[#allocation7 + $0x270] sm:$0xff]
    %v516 = vld [vmem:[#allocation7 + $0x278] sm:$0xff]
    %v517 = vld [vmem:[#allocation7 + $0x280] sm:$0xff]
    %v518 = vld [vmem:[#allocation7 + $0x288] sm:$0xff]
    %v519 = vld [vmem:[#allocation7 + $0x290] sm:$0xff]
    %v520 = vld [vmem:[#allocation7 + $0x298] sm:$0xff]
    %v521 = vld [vmem:[#allocation7 + $0x2a0] sm:$0xff]
    %v522 = vld [vmem:[#allocation7 + $0x2a8] sm:$0xff]
    %v523 = vld [vmem:[#allocation7 + $0x2b0] sm:$0xff]
    %v524 = vld [vmem:[#allocation7 + $0x2b8] sm:$0xff]
    %v525 = vld [vmem:[#allocation7 + $0x2c0] sm:$0xff]
    %v526 = vld [vmem:[#allocation7 + $0x2c8] sm:$0xff]
    %v527 = vld [vmem:[#allocation7 + $0x2d0] sm:$0xff]
    %v528 = vld [vmem:[#allocation7 + $0x2d8] sm:$0xff]
    %v529 = vld [vmem:[#allocation7 + $0x2e0] sm:$0xff]
    %v530 = vld [vmem:[#allocation7 + $0x2e8] sm:$0xff]
    %v531 = vld [vmem:[#allocation7 + $0x2f0] sm:$0xff]
    %v532 = vld [vmem:[#allocation7 + $0x2f8] sm:$0xff]
    %v533 = vld [vmem:[#allocation7 + $0x300] sm:$0xff]
    %v534 = vld [vmem:[#allocation7 + $0x308] sm:$0xff]
    %v535 = vld [vmem:[#allocation7 + $0x310] sm:$0xff]
    %v536 = vld [vmem:[#allocation7 + $0x318] sm:$0xff]
    %v537 = vld [vmem:[#allocation7 + $0x320] sm:$0xff]
    %v538 = vld [vmem:[#allocation7 + $0x328] sm:$0xff]
    %v539 = vld [vmem:[#allocation7 + $0x330] sm:$0xff]
    %v540 = vld [vmem:[#allocation7 + $0x338] sm:$0xff]
    %v541 = vld [vmem:[#allocation7 + $0x340] sm:$0xff]
    %v542 = vld [vmem:[#allocation7 + $0x348] sm:$0xff]
    %v543 = vld [vmem:[#allocation7 + $0x350] sm:$0xff]
    %v544 = vld [vmem:[#allocation7 + $0x358] sm:$0xff]
    %v545 = vld [vmem:[#allocation7 + $0x360] sm:$0xff]
    %v546 = vld [vmem:[#allocation7 + $0x368] sm:$0xff]
    %v547 = vld [vmem:[#allocation7 + $0x370] sm:$0xff]
    %v548 = vld [vmem:[#allocation7 + $0x378] sm:$0xff]
    %v549 = vld [vmem:[#allocation7 + $0x380] sm:$0xff]
    %v550 = vld [vmem:[#allocation7 + $0x388] sm:$0xff]
    %v551 = vld [vmem:[#allocation7 + $0x390] sm:$0xff]
    %v552 = vld [vmem:[#allocation7 + $0x398] sm:$0xff]
    %v553 = vld [vmem:[#allocation7 + $0x3a0] sm:$0xff]
    %v554 = vld [vmem:[#allocation7 + $0x3a8] sm:$0xff]
    %v555 = vld [vmem:[#allocation7 + $0x3b0] sm:$0xff]
    %v556 = vld [vmem:[#allocation7 + $0x3b8] sm:$0xff]
    %v557 = vld [vmem:[#allocation7 + $0x3c0] sm:$0xff]
    %v558 = vld [vmem:[#allocation7 + $0x3c8] sm:$0xff]
    %v559 = vld [vmem:[#allocation7 + $0x3d0] sm:$0xff]
    %v560 = vld [vmem:[#allocation7 + $0x3d8] sm:$0xff]
    %v561 = vld [vmem:[#allocation7 + $0x3e0] sm:$0xff]
    %v562 = vld [vmem:[#allocation7 + $0x3e8] sm:$0xff]
    %v563 = vld [vmem:[#allocation7 + $0x3f0] sm:$0xff]
    %v564 = vld [vmem:[#allocation7 + $0x3f8] sm:$0xff]
    %v565 = vpack.c.bf16 %v439, %v437
    %v566 = vpack.c.bf16 %v440, %v438
    %v567 = vpack.c.bf16 %v443, %v441
    %v568 = vpack.c.bf16 %v444, %v442
    %v569 = vpack.c.bf16 %v447, %v445
    %v570 = vpack.c.bf16 %v448, %v446
    %v571 = vpack.c.bf16 %v451, %v449
    %v572 = vpack.c.bf16 %v452, %v450
    %v573 = vpack.c.bf16 %v455, %v453
    %v574 = vpack.c.bf16 %v456, %v454
    %v575 = vpack.c.bf16 %v459, %v457
    %v576 = vpack.c.bf16 %v460, %v458
    %v577 = vpack.c.bf16 %v463, %v461
    %v578 = vpack.c.bf16 %v464, %v462
    %v579 = vpack.c.bf16 %v467, %v465
    %v580 = vpack.c.bf16 %v468, %v466
    %v581 = vpack.c.bf16 %v471, %v469
    %v582 = vpack.c.bf16 %v472, %v470
    %v583 = vpack.c.bf16 %v475, %v473
    %v584 = vpack.c.bf16 %v476, %v474
    %v585 = vpack.c.bf16 %v479, %v477
    %v586 = vpack.c.bf16 %v480, %v478
    %v587 = vpack.c.bf16 %v483, %v481
    %v588 = vpack.c.bf16 %v484, %v482
    %v589 = vpack.c.bf16 %v487, %v485
    %v590 = vpack.c.bf16 %v488, %v486
    %v591 = vpack.c.bf16 %v491, %v489
    %v592 = vpack.c.bf16 %v492, %v490
    %v593 = vpack.c.bf16 %v495, %v493
    %v594 = vpack.c.bf16 %v496, %v494
    %v595 = vpack.c.bf16 %v499, %v497
    %v596 = vpack.c.bf16 %v500, %v498
    %v597 = vpack.c.bf16 %v503, %v501
    %v598 = vpack.c.bf16 %v504, %v502
    %v599 = vpack.c.bf16 %v507, %v505
    %v600 = vpack.c.bf16 %v508, %v506
    %v601 = vpack.c.bf16 %v511, %v509
    %v602 = vpack.c.bf16 %v512, %v510
    %v603 = vpack.c.bf16 %v515, %v513
    %v604 = vpack.c.bf16 %v516, %v514
    %v605 = vpack.c.bf16 %v519, %v517
    %v606 = vpack.c.bf16 %v520, %v518
    %v607 = vpack.c.bf16 %v523, %v521
    %v608 = vpack.c.bf16 %v524, %v522
    %v609 = vpack.c.bf16 %v527, %v525
    %v610 = vpack.c.bf16 %v528, %v526
    %v611 = vpack.c.bf16 %v531, %v529
    %v612 = vpack.c.bf16 %v532, %v530
    %v613 = vpack.c.bf16 %v535, %v533
    %v614 = vpack.c.bf16 %v536, %v534
    %v615 = vpack.c.bf16 %v539, %v537
    %v616 = vpack.c.bf16 %v540, %v538
    %v617 = vpack.c.bf16 %v543, %v541
    %v618 = vpack.c.bf16 %v544, %v542
    %v619 = vpack.c.bf16 %v547, %v545
    %v620 = vpack.c.bf16 %v548, %v546
    %v621 = vpack.c.bf16 %v551, %v549
    %v622 = vpack.c.bf16 %v552, %v550
    %v623 = vpack.c.bf16 %v555, %v553
    %v624 = vpack.c.bf16 %v556, %v554
    %v625 = vpack.c.bf16 %v559, %v557
    %v626 = vpack.c.bf16 %v560, %v558
    %v627 = vpack.c.bf16 %v563, %v561
    %v628 = vpack.c.bf16 %v564, %v562
    %v629 = vpack.c.bf16 %v87, %v87
    %v630 = vld [vmem:[#allocation8] sm:$0xff]
    %v632 = vcombine.high %v630, %v630
    %v634 = vpack.c.bf16 %v630, %v630
    %v635 = vpack.c.bf16 %v632, %v632
    %vm636 = vcmask 31744
    %v638 = vsel %vm636, %v629, 0
    %vm640 = vcmask 1041408
    %v642 = vsel %vm640, %v634, 0
    %v645 = vsel %vm640, %v635, 0
    %647 = vmatprep.subr.bf16.mxu0 0
    %648 = vmatpush1.bf16.msra.mxu0 0
    %649 = vmatprep.subr.bf16.mxu0 0
    %650 = vmatpush1.bf16.msra.mxu0 0
    %651 = vmatprep.subr.bf16.mxu0 0
    %652 = vmatpush1.bf16.msra.mxu0 0
    %653 = vmatprep.subr.bf16.mxu0 0
    %654 = vmatpush1.bf16.msra.mxu0 0
    %655 = vmatprep.subr.bf16.mxu0 0
    %656 = vmatpush1.bf16.msra.mxu0 0
    %657 = vmatprep.subr.bf16.mxu0 0
    %658 = vmatpush1.bf16.msra.mxu0 0
    %659 = vmatprep.subr.bf16.mxu0 0
    %660 = vmatpush1.bf16.msra.mxu0 0
    %661 = vmatprep.subr.bf16.mxu0 %v645
    %662 = vmatpush1.bf16.msra.mxu0 %v642
    %663 = vmatprep.subr.bf16.mxu0 0
    %664 = vmatpush2.bf16.msra.mxu0 0
    %665 = vmatprep.subr.bf16.mxu0 0
    %666 = vmatpush2.bf16.msra.mxu0 0
    %667 = vmatprep.subr.bf16.mxu0 0
    %668 = vmatpush2.bf16.msra.mxu0 0
    %669 = vmatprep.subr.bf16.mxu0 0
    %670 = vmatpush2.bf16.msra.mxu0 0
    %671 = vmatprep.subr.bf16.mxu0 0
    %672 = vmatpush2.bf16.msra.mxu0 0
    %673 = vmatprep.subr.bf16.mxu0 0
    %674 = vmatpush2.bf16.msra.mxu0 0
    %675 = vmatprep.subr.bf16.mxu0 0
    %676 = vmatpush2.bf16.msra.mxu0 0
    %677 = vmatprep.subr.bf16.mxu0 0
    %678 = vmatpush2.bf16.msra.mxu0 0
    %679 = vmatprep.mubr.bf16.mxu0 0
    %680 = vmatmul.mubr.bf16.gmra.mxu0 %v638
    %v681 = vpop.f32.mrf.mxu0
    %v682 = vadd.f32 0.0, %v681
    %v683 = vpop.f32.mrf.mxu0
    %v684 = vadd.f32 0.0, %v683
    %v685 = vpop.f32.mrf.mxu0
    %v686 = vpop.f32.mrf.mxu0
    %687 = vdwg.mxu0
    %688 = vmatprep.subr.bf16.mxu0 %v580
    %689 = vmatpush1.bf16.msra.mxu0 %v579
    %690 = vmatprep.subr.bf16.mxu0 %v578
    %691 = vmatpush1.bf16.msra.mxu0 %v577
    %692 = vmatprep.subr.bf16.mxu0 %v576
    %693 = vmatpush1.bf16.msra.mxu0 %v575
    %694 = vmatprep.subr.bf16.mxu0 %v574
    %695 = vmatpush1.bf16.msra.mxu0 %v573
    %696 = vmatprep.subr.bf16.mxu0 %v572
    %697 = vmatpush1.bf16.msra.mxu0 %v571
    %698 = vmatprep.subr.bf16.mxu0 %v570
    %699 = vmatpush1.bf16.msra.mxu0 %v569
    %700 = vmatprep.subr.bf16.mxu0 %v568
    %701 = vmatpush1.bf16.msra.mxu0 %v567
    %702 = vmatprep.subr.bf16.mxu0 %v566
    %703 = vmatpush1.bf16.msra.mxu0 %v565
    %704 = vmatprep.subr.bf16.mxu0 %v596
    %705 = vmatpush2.bf16.msra.mxu0 %v595
    %706 = vmatprep.subr.bf16.mxu0 %v594
    %707 = vmatpush2.bf16.msra.mxu0 %v593
    %708 = vmatprep.subr.bf16.mxu0 %v592
    %709 = vmatpush2.bf16.msra.mxu0 %v591
    %710 = vmatprep.subr.bf16.mxu0 %v590
    %711 = vmatpush2.bf16.msra.mxu0 %v589
    %712 = vmatprep.subr.bf16.mxu0 %v588
    %713 = vmatpush2.bf16.msra.mxu0 %v587
    %714 = vmatprep.subr.bf16.mxu0 %v586
    %715 = vmatpush2.bf16.msra.mxu0 %v585
    %716 = vmatprep.subr.bf16.mxu0 %v584
    %717 = vmatpush2.bf16.msra.mxu0 %v583
    %718 = vmatprep.subr.bf16.mxu0 %v582
    %719 = vmatpush2.bf16.msra.mxu0 %v581
    %720 = vmatprep.mubr.bf16.mxu0 %v434
    %721 = vmatmul.mubr.bf16.gmra.mxu0 %v433
    %v722 = vpop.f32.mrf.mxu0
    %v723 = vadd.f32 %v682, %v722
    %v724 = vpop.f32.mrf.mxu0
    %v725 = vadd.f32 %v684, %v724
    %v726 = vpop.f32.mrf.mxu0
    %v727 = vpop.f32.mrf.mxu0
    %728 = vdwg.mxu0
    %729 = vmatprep.subr.bf16.mxu0 %v612
    %730 = vmatpush1.bf16.msra.mxu0 %v611
    %731 = vmatprep.subr.bf16.mxu0 %v610
    %732 = vmatpush1.bf16.msra.mxu0 %v609
    %733 = vmatprep.subr.bf16.mxu0 %v608
    %734 = vmatpush1.bf16.msra.mxu0 %v607
    %735 = vmatprep.subr.bf16.mxu0 %v606
    %736 = vmatpush1.bf16.msra.mxu0 %v605
    %737 = vmatprep.subr.bf16.mxu0 %v604
    %738 = vmatpush1.bf16.msra.mxu0 %v603
    %739 = vmatprep.subr.bf16.mxu0 %v602
    %740 = vmatpush1.bf16.msra.mxu0 %v601
    %741 = vmatprep.subr.bf16.mxu0 %v600
    %742 = vmatpush1.bf16.msra.mxu0 %v599
    %743 = vmatprep.subr.bf16.mxu0 %v598
    %744 = vmatpush1.bf16.msra.mxu0 %v597
    %745 = vmatprep.subr.bf16.mxu0 %v628
    %746 = vmatpush2.bf16.msra.mxu0 %v627
    %747 = vmatprep.subr.bf16.mxu0 %v626
    %748 = vmatpush2.bf16.msra.mxu0 %v625
    %749 = vmatprep.subr.bf16.mxu0 %v624
    %750 = vmatpush2.bf16.msra.mxu0 %v623
    %751 = vmatprep.subr.bf16.mxu0 %v622
    %752 = vmatpush2.bf16.msra.mxu0 %v621
    %753 = vmatprep.subr.bf16.mxu0 %v620
    %754 = vmatpush2.bf16.msra.mxu0 %v619
    %755 = vmatprep.subr.bf16.mxu0 %v618
    %756 = vmatpush2.bf16.msra.mxu0 %v617
    %757 = vmatprep.subr.bf16.mxu0 %v616
    %758 = vmatpush2.bf16.msra.mxu0 %v615
    %759 = vmatprep.subr.bf16.mxu0 %v614
    %760 = vmatpush2.bf16.msra.mxu0 %v613
    %761 = vmatprep.mubr.bf16.mxu0 %v436
    %762 = vmatmul.mubr.bf16.gmra.mxu0 %v435
    %v763 = vpop.f32.mrf.mxu0
    %v764 = vadd.f32 %v723, %v763
    %v765 = vpop.f32.mrf.mxu0
    %v766 = vadd.f32 %v725, %v765
    %v767 = vpop.f32.mrf.mxu0
    %v768 = vpop.f32.mrf.mxu0
    %769 = vdwg.mxu0
    %v771 = vlaneseq
    %v772 = vshrl.u32 %v771, 7
    %v773 = vsub.s32 0, %v772
    %v774 = vrot.slane %v90, %v773
    %v775 = vlaneseq
    %v776 = vshrl.u32 %v775, 7
    %v777 = vsub.s32 4, %v776
    %v778 = vrot.slane %v90, %v777
    %v781 = vlaneseq
    %v782 = vshrl.u32 %v781, 7
    %v783 = vsub.s32 0, %v782
    %v784 = vrot.slane %v774, %v783
    %v785 = vlaneseq
    %v786 = vshrl.u32 %v785, 7
    %v787 = vsub.s32 0, %v786
    %v788 = vrot.slane %v778, %v787
    %v789 = vadd.f32 %v764, %v784
    %v790 = vadd.f32 %v766, %v788
    %v791 = vrot.slane %v789, 4
    %v792 = vadd.f32 %v789, %v791
    %v793 = vrot.slane %v792, 2
    %v794 = vadd.f32 %v792, %v793
    %v795 = vrot.slane %v794, 1
    %v796 = vadd.f32 %v794, %v795
    %v797 = vrot.slane %v790, 4
    %v798 = vadd.f32 %v790, %v797
    %v799 = vrot.slane %v798, 2
    %v800 = vadd.f32 %v798, %v799
    %v801 = vrot.slane %v800, 1
    %v802 = vadd.f32 %v800, %v801
    %v803 = vmul.f32 %v796, %v264
    %v804 = vmul.f32 %v802, %v264
    %v805 = vmul.f32 %v789, %v789
    %v806 = vmul.f32 %v790, %v790
    %v807 = vrot.slane %v805, 4
    %v808 = vadd.f32 %v805, %v807
    %v809 = vrot.slane %v808, 2
    %v810 = vadd.f32 %v808, %v809
    %v811 = vrot.slane %v810, 1
    %v812 = vadd.f32 %v810, %v811
    %v813 = vrot.slane %v806, 4
    %v814 = vadd.f32 %v806, %v813
    %v815 = vrot.slane %v814, 2
    %v816 = vadd.f32 %v814, %v815
    %v817 = vrot.slane %v816, 1
    %v818 = vadd.f32 %v816, %v817
    %v819 = vmul.f32 %v812, %v264
    %v820 = vmul.f32 %v818, %v264
    %v821 = vmul.f32 %v803, %v803
    %v822 = vmul.f32 %v804, %v804
    %v823 = vsub.f32 %v819, %v821
    %v824 = vsub.f32 %v820, %v822
    %v825 = vadd.f32 %v823, 1e-05
    %v826 = vadd.f32 %v824, 1e-05
    %v827 = vrsqrt.pop %v825
    %v828 = vrsqrt.pop %v826
    %v831 = vcombine.low %v827, %v828
    %v832 = vrot.slane %v831, 7
    %v834 = vmul.f32 %v90, %v832
    %v836 = vlaneseq
    %v837 = vshrl.u32 %v836, 7
    %v838 = vsub.s32 1, %v837
    %v839 = vrot.slane %v834, %v838
    %v840 = vlaneseq
    %v841 = vshrl.u32 %v840, 7
    %v842 = vsub.s32 5, %v841
    %v843 = vrot.slane %v834, %v842
    %v846 = vmul.f32 %v803, %v839
    %v847 = vmul.f32 %v804, %v843
    %v850 = vcombine.low %v846, %v847
    %v851 = vrot.slane %v850, 6
    %v853 = vsub.f32 %v90, %v851
    %v854 = vlaneseq
    %v855 = vshrl.u32 %v854, 7
    %v856 = vsub.s32 1, %v855
    %v857 = vrot.slane %v839, %v856
    %v858 = vlaneseq
    %v859 = vshrl.u32 %v858, 7
    %v860 = vsub.s32 1, %v859
    %v861 = vrot.slane %v843, %v860
    %v862 = vmul.f32 %v789, %v857
    %v863 = vmul.f32 %v790, %v861
    %v865 = vlaneseq
    %v866 = vshrl.u32 %v865, 7
    %v867 = vsub.s32 2, %v866
    %v868 = vrot.slane %v853, %v867
    %v869 = vlaneseq
    %v870 = vshrl.u32 %v869, 7
    %v871 = vsub.s32 6, %v870
    %v872 = vrot.slane %v853, %v871
    %v875 = vlaneseq
    %v876 = vshrl.u32 %v875, 7
    %v877 = vsub.s32 2, %v876
    %v878 = vrot.slane %v868, %v877
    %v879 = vlaneseq
    %v880 = vshrl.u32 %v879, 7
    %v881 = vsub.s32 2, %v880
    %v882 = vrot.slane %v872, %v881
    %v883 = vadd.f32 %v862, %v878
    %v884 = vadd.f32 %v863, %v882
    %v885 = vmax.f32 %v883, 0.0
    %v886 = vmax.f32 %v884, 0.0
    %v887 = vld [vmem:[%s7] sm:$0x3]
    %v889 = vlaneseq
    %v890 = vshrl.u32 %v889, 7
    %v891 = vsub.s32 0, %v890
    %v892 = vrot.slane %v887, %v891
    %v893 = vlaneseq
    %v894 = vshrl.u32 %v893, 7
    %v895 = vsub.s32 1, %v894
    %v896 = vrot.slane %v887, %v895
    %v899 = vmul.f32 %v885, %v892
    %v900 = vmul.f32 %v886, %v896
    %v901 = vadd.f32 %v899, %v900
    %902 = vadd.xlane.f32.xlu0 %v901
    %v903 = vpop.xlane.xlu0 %902
    %v904 = vld [vmem:[#allocation2] sm:$0x1]
    %v906 = vlaneseq
    %v907 = vshrl.u32 %v906, 7
    %v908 = vsub.s32 0, %v907
    %v909 = vrot.slane %v904, %v908
    %v911 = vadd.f32 %v903, %v909
    %vm912 = vcmask 7168
    %913 = vst.msk [vmem:[%s9] sm:$0xff] %vm912, %v911
    // Predicated region
    $region54: #{tpu_custom_call.1} parent=1 // pred_check
      _
    $region55: #{tpu_custom_call.1} parent=1 // pred_check_branch
      %915 = sbr.rel (0) target = $region57
    $region56: #{tpu_custom_call.1} parent=1 // pred_region
      _
    $region57: #{tpu_custom_call.1} parent=1 // pred_fallthru
      _
    // Predicated region
    $region58: #{tpu_custom_call.1} parent=1 // pred_check
      _
    $region59: #{tpu_custom_call.1} parent=1 // pred_check_branch
      %917 = sbr.rel (0) target = $region61
    $region60: #{tpu_custom_call.1} parent=1 // pred_region
      _
    $region61: #{tpu_custom_call.1} parent=1 // pred_fallthru
      _
    %918 = vsyncpa [#allocation4], 1
    %919 = vsyncpa [#allocation6], 1
    %920 = vsyncpa [#allocation9], 1

</llo_original>
